<compile_context>
chip_gen: v5e
topology: v5e:2x2
jax: 0.10.0
libtpu: 0.0.40
codegen_flags: <defaults>
</compile_context>

<pallas_src>
import jax
import jax.numpy as jnp
from jax.experimental import pallas as pl
from jax.experimental.pallas import tpu as pltpu


_CHUNK_THRESHOLD_BYTES = 8 * 1024 * 1024   # only bother chunking big copies
_MAX_CHUNKS = 4


def _make_dma_copy_kernel(n_chunks, chunk_rows):
    """Build an HBM->HBM copy body: start all chunk DMAs, then wait on all."""

    def kernel(x_ref, o_ref, sem):
        copies = []
        for c in range(n_chunks):
            if n_chunks == 1:
                src, dst = x_ref, o_ref
            else:
                sl = pl.ds(c * chunk_rows, chunk_rows)
                src, dst = x_ref.at[sl], o_ref.at[sl]
            copies.append(pltpu.make_async_copy(src, dst, sem.at[c]))
        for cp in copies:          # issue every DMA first ...
            cp.start()
        for cp in copies:          # ... then retire them (overlapped).
            cp.wait()

    return kernel


def _pick_chunks(shape, nbytes):
    """Number of equal leading-dim chunks (1 if small or not divisible)."""
    if not shape or nbytes < _CHUNK_THRESHOLD_BYTES:
        return 1
    lead = shape[0]
    for n in range(_MAX_CHUNKS, 1, -1):
        if lead % n == 0:
            return n
    return 1


def noop_forward(x):
    """Identity forward pass: one (optionally chunked) direct HBM->HBM DMA."""
    if x.size == 0:
        return x                                  # identity of empty tensor

    orig_shape = x.shape
    xr = x.reshape(1) if x.ndim == 0 else x       # DMA wants at least rank 1

    nbytes = xr.size * jnp.dtype(xr.dtype).itemsize
    n_chunks = _pick_chunks(xr.shape, nbytes)
    chunk_rows = xr.shape[0] // n_chunks

    out = pl.pallas_call(
        _make_dma_copy_kernel(n_chunks, chunk_rows),
        out_shape=jax.ShapeDtypeStruct(xr.shape, xr.dtype),
        in_specs=[pl.BlockSpec(memory_space=pl.ANY)],
        out_specs=pl.BlockSpec(memory_space=pl.ANY),
        scratch_shapes=[pltpu.SemaphoreType.DMA((n_chunks,))],
        cost_estimate=pl.CostEstimate(
            flops=0, transcendentals=0, bytes_accessed=2 * nbytes),
    )(xr)

    return out.reshape(orig_shape)


def _alias_touch_kernel(x_ref, o_ref):
    # Output physically aliases the input buffer (input_output_aliases={0: 0});
    # no data movement is needed.  touch() just pins the dependency so the
    # aliased output materializes after this call.
    pltpu.touch(o_ref)


def noop_forward_aliased(x):
    """Zero-HBM-traffic identity: the output buffer aliases the input buffer.

    Use when the caller donates x (e.g. jax.jit(..., donate_argnums=0));
    without donation XLA inserts a defensive copy, which is why the demo in
    __main__ runs the explicit-copy kernel instead.
    """
    if x.size == 0:
        return x
    return pl.pallas_call(
        _alias_touch_kernel,
        out_shape=jax.ShapeDtypeStruct(x.shape, x.dtype),
        in_specs=[pl.BlockSpec(memory_space=pl.ANY)],
        out_specs=pl.BlockSpec(memory_space=pl.ANY),
        input_output_aliases={0: 0},
        cost_estimate=pl.CostEstimate(
            flops=0, transcendentals=0, bytes_accessed=0),
    )(x)


if __name__ == "__main__":
    key = jax.random.PRNGKey(0)
    # Small NCHW-style input consistent with the module interface.
    x = jax.random.normal(key, (2, 4, 16, 16), dtype=jnp.float32)

    y = noop_forward(x)
    jax.block_until_ready(y)

    assert y.shape == x.shape and y.dtype == x.dtype
    assert bool(jnp.all(y == x))

    print("KERNEL_OK")
</pallas_src>

<mosaic_0001>
module attributes {stable_mosaic.version = 11 : i64} {
  func.func @kernel(%arg0: memref<2x4x16x16xf32, #tpu.memory_space<any>>, %arg1: memref<2x4x16x16xf32, #tpu.memory_space<any>>, %arg2: memref<1x!tpu.dma_semaphore, #tpu.memory_space<semaphore_mem>>) attributes {dimension_semantics = [], scalar_prefetch = 0 : i64, scratch_operands = 1 : i64, tpu.core_type = #tpu.core_type<tc>} {
    %c0_i32 = arith.constant 0 : i32
    %0 = tpu.memref_slice %arg2[%c0_i32] : memref<1x!tpu.dma_semaphore, #tpu.memory_space<semaphore_mem>> -> memref<1x!tpu.dma_semaphore, #tpu.memory_space<semaphore_mem>>
    %1 = tpu.memref_squeeze %0 : memref<1x!tpu.dma_semaphore, #tpu.memory_space<semaphore_mem>> -> memref<!tpu.dma_semaphore, #tpu.memory_space<semaphore_mem>>
    tpu.enqueue_dma source(%arg0 : memref<2x4x16x16xf32, #tpu.memory_space<any>>) target(%arg1 : memref<2x4x16x16xf32, #tpu.memory_space<any>>) target_semaphore(%1 : memref<!tpu.dma_semaphore, #tpu.memory_space<semaphore_mem>>)
    %c0_i32_0 = arith.constant 0 : i32
    %2 = tpu.memref_slice %arg2[%c0_i32_0] : memref<1x!tpu.dma_semaphore, #tpu.memory_space<semaphore_mem>> -> memref<1x!tpu.dma_semaphore, #tpu.memory_space<semaphore_mem>>
    %3 = tpu.memref_squeeze %2 : memref<1x!tpu.dma_semaphore, #tpu.memory_space<semaphore_mem>> -> memref<!tpu.dma_semaphore, #tpu.memory_space<semaphore_mem>>
    tpu.wait_dma2 semaphore(%3 : memref<!tpu.dma_semaphore, #tpu.memory_space<semaphore_mem>>) src(%arg0 : memref<2x4x16x16xf32, #tpu.memory_space<any>>) dst(%arg1 : memref<2x4x16x16xf32, #tpu.memory_space<any>>)
    return
  }
}

</mosaic_0001>

<llo_original>
// kernel: tpu_custom_call.1
$region0: #{tpu_custom_call.1}
  #allocation0 [shape = 'u32[]', space=smem, size = 0x4, offset = 0x4, fixed_abs, tag = 'smem constant byte address 0x4 - core index']
  #allocation1 [shape = 'u32[72,128]{1,0:T(1,128)}', space=vmem, size = 0x9000, scoped, tag = 'internal scratch']
  #allocation2 [shape = 's32[1]{0}', space=sflag, size = 0x4, scoped, tag = 'scratch operand']
  #allocation3 [shape = 's32[]', space=sflag, size = 0x4, offset = 0, fixed_abs, tag = 'sflag constant byte address 0x0 - dummy sync flag']
  #allocation4 [shape = 'u32[0]{0}', space=smem, size = 0, offset = 0, fixed_abs, tag = 'smem constant byte address 0x0 - null']
  %s0 = inlined_call_operand.hbm [shape: f32[2,4,16,16], index: 0, kind: input, shape index: {}]
  %s1 = inlined_call_operand.hbm [shape: f32[2,4,16,16], index: 1, kind: output, shape index: {}]
  %s2 = sld [smem:[#allocation0]]
  $region2: #{tpu_custom_call.1} parent=0
    _
  %s4 = ssub.s32 1, %s2
  %s5 = scalar_select 0, %s4, %s2
  %s7 = sshll.u32 1, 14
  %s8 = sxor.u32 4294967295, %s7
  %s10 = sshll.u32 %s0, 4
  %s11 = int_to_ptr.hbm [resolvable:$true] %s10
  %s12 = sshll.u32 %s1, 4
  %s13 = int_to_ptr.hbm [resolvable:$true] %s12
  %16 = dma.general %s11, 2048, %s13, [#allocation2], [#allocation3], [#allocation4], 0, 0
  %s17 = smul.u32 2, 4
  %s18 = smul.u32 %s17, 16
  %s19 = smul.u32 %s18, 1
  %s20 = sshll.u32 %s19, 4
  %21 = dma.done [#allocation2], %s20
  %22 = vsyncmov [#allocation2]
  %s23 = vpop.sfrf %22
  %p24 = scmp.eq.s32.totalorder %s23, 0
  %p25 = pneg %p24
  %27 = shalt.err (%p25)

</llo_original>
